<compile_context>
chip_gen: v7x
topology: tpu7x:2x2x1
jax: 0.10.0
libtpu: 0.0.40
codegen_flags: <defaults>
</compile_context>

<pallas_src>
import functools

import jax
import jax.numpy as jnp
from jax.experimental import pallas as pl
from jax.experimental.pallas import tpu as pltpu

HIDDEN = 128


def _round_up(x, m):
    return (x + m - 1) // m * m


def _mxu_is_256():
    """256x256 MXU (v6e / v7x) vs 128x128 (v2-v5)."""
    try:
        kind = jax.devices()[0].device_kind.lower()
    except Exception:
        return True
    for v in ("v2", "v3", "v4", "v5"):
        if v in kind:
            return False
    return True


def ppo_kernel(x_ref, w1f_ref, b1f_ref, *rest, out_dim, fuse_l2):
    if fuse_l2:
        (w2f_ref, b2f_ref, aw3p_ref, ab3p_ref, cw3r_ref, cb3_ref, out_ref) = rest
    else:
        (aw2_ref, ab2_ref, cw2_ref, cb2_ref,
         aw3p_ref, ab3p_ref, cw3r_ref, cb3_ref, out_ref) = rest

    bf = jnp.bfloat16
    x = x_ref[...].astype(bf)                      # cast only at the dot operand

    # ---- fused layer 1: one (TB,in)@(in,256) matmul shared by actor+critic ----
    f1 = jnp.dot(x, w1f_ref[...], preferred_element_type=jnp.float32) + b1f_ref[...]
    f1 = jnp.maximum(f1, 0.0)                      # f32 elementwise

    # ---- layer 2 ----
    if fuse_l2:
        # Block-diagonal (TB,256)@(256,256): fills the 256x256 MXU (v6e/v7x).
        f2 = jnp.dot(f1.astype(bf), w2f_ref[...],
                     preferred_element_type=jnp.float32) + b2f_ref[...]
        f2 = jnp.maximum(f2, 0.0)
        h = f2[:, :HIDDEN]                         # actor hidden
        g = f2[:, HIDDEN:]                         # critic hidden
    else:
        h = f1[:, :HIDDEN]
        g = f1[:, HIDDEN:]
        h = jnp.maximum(
            jnp.dot(h.astype(bf), aw2_ref[...],
                    preferred_element_type=jnp.float32) + ab2_ref[...], 0.0)
        g = jnp.maximum(
            jnp.dot(g.astype(bf), cw2_ref[...],
                    preferred_element_type=jnp.float32) + cb2_ref[...], 0.0)

    # ---- actor head: pad-lane masking baked into ab3p (pad cols = -1e30) ----
    logits = jnp.dot(h.astype(bf), aw3p_ref[...],
                     preferred_element_type=jnp.float32) + ab3p_ref[...]
    m = jnp.max(logits, axis=-1, keepdims=True)
    e = jnp.exp(logits - m)                        # pad lanes underflow to 0
    denom = jnp.sum(e, axis=-1, keepdims=True)
    r = pl.reciprocal(denom, approx=True)          # EUP
    r = r * (2.0 - denom * r)                      # one Newton step -> ~f32 exact
    probs = e * r

    # ---- critic head (N=1): VPU multiply + lane reduce, no MXU pass (f32) ----
    value = jnp.sum(g * cw3r_ref[...], axis=-1, keepdims=True) + cb3_ref[0]

    # ---- narrow output: cols [0,out_dim)=probs, col out_dim = value ----
    col = jax.lax.broadcasted_iota(jnp.int32, probs.shape, 1)
    merged = jnp.where(col == out_dim, value, probs)
    out_ref[...] = merged[:, :out_dim + 1]


def pack_ppo_params(params, *, fuse_l2):
    """One-time repack of raw params into the kernel layout (hoisted off the
    per-forward path). Weights -> bf16 (MXU operands); biases stay f32."""
    h = HIDDEN
    out_dim = params["aw3"].shape[1]
    assert out_dim >= 1, "output_dim must be >= 1"
    out_pad = _round_up(out_dim + 1, 128)          # lane-dense head width for MXU
    bf = jnp.bfloat16

    w1f = jnp.concatenate([params["aw1"], params["cw1"]], axis=1).astype(bf)  # (in,256)
    b1f = jnp.concatenate([params["ab1"], params["cb1"]], axis=1)             # (1,256) f32
    aw3p = (jnp.zeros((h, out_pad), jnp.float32)
            .at[:, :out_dim].set(params["aw3"]).astype(bf))                   # (128,out_pad)
    # Pad-lane masking folded into the bias: pad logits = -1e30 -> exp() == 0.
    ab3p = (jnp.full((1, out_pad), -1e30, jnp.float32)
            .at[:, :out_dim].set(params["ab3"]))
    cw3r = params["cw3"].T.astype(jnp.float32)                                # (1,128) f32
    cb3 = params["cb3"].reshape((1,)).astype(jnp.float32)

    packed = dict(w1f=w1f, b1f=b1f, aw3p=aw3p, ab3p=ab3p, cw3r=cw3r, cb3=cb3,
                  out_dim=out_dim, input_dim=params["aw1"].shape[0],
                  fuse_l2=bool(fuse_l2))
    if fuse_l2:
        w2f = jnp.zeros((2 * h, 2 * h), jnp.float32)
        w2f = w2f.at[:h, :h].set(params["aw2"]).at[h:, h:].set(params["cw2"])
        packed["w2f"] = w2f.astype(bf)
        packed["b2f"] = jnp.concatenate([params["ab2"], params["cb2"]], axis=1)
    else:
        packed["aw2"] = params["aw2"].astype(bf)
        packed["ab2"] = params["ab2"]
        packed["cw2"] = params["cw2"].astype(bf)
        packed["cb2"] = params["cb2"]
    return packed


def ppo_forward(state, packed, *, block_b=512):
    """state: (B, input_dim) f32; packed: dict from pack_ppo_params."""
    B, input_dim = state.shape
    assert input_dim == packed["input_dim"]
    h = HIDDEN
    out_dim = packed["out_dim"]
    out_pad = packed["aw3p"].shape[1]
    fuse_l2 = packed["fuse_l2"]
    nout = out_dim + 1

    # Batch tile: multiple of 8, capped so the grid has >=2 steps whenever B
    # allows it (both v7x TensorCores get work via the "parallel" axis).
    tb = max(8, min(block_b, _round_up(pl.cdiv(B, 2), 8)))
    b_pad = _round_up(B, tb)
    x = state if b_pad == B else jnp.pad(state, ((0, b_pad - B), (0, 0)))
    # Padded (zero) rows produce garbage probs/values; they are sliced off below.

    grid = (b_pad // tb,)

    def resident(shape):
        # Constant block index -> weight stays resident in VMEM across steps.
        return pl.BlockSpec(shape, lambda i: (0, 0))

    in_specs = [pl.BlockSpec((tb, input_dim), lambda i: (i, 0)),   # state (tiled)
                resident((input_dim, 2 * h)), resident((1, 2 * h))]  # fused layer 1
    args = [x, packed["w1f"], packed["b1f"]]
    if fuse_l2:
        in_specs += [resident((2 * h, 2 * h)), resident((1, 2 * h))]
        args += [packed["w2f"], packed["b2f"]]
    else:
        in_specs += [resident((h, h)), resident((1, h)),
                     resident((h, h)), resident((1, h))]
        args += [packed["aw2"], packed["ab2"], packed["cw2"], packed["cb2"]]
    in_specs += [resident((h, out_pad)), resident((1, out_pad)),   # actor head
                 resident((1, h)),                                 # critic head row
                 pl.BlockSpec(memory_space=pltpu.MemorySpace.SMEM)]  # critic bias
    args += [packed["aw3p"], packed["ab3p"], packed["cw3r"], packed["cb3"]]

    l2_flops = (2 * h) * (2 * h) if fuse_l2 else 2 * h * h
    flops = 2 * b_pad * (input_dim * 2 * h + l2_flops + h * out_pad + h)
    bytes_accessed = (4 * b_pad * (input_dim + nout)
                      + sum(int(a.size) * a.dtype.itemsize for a in args[1:]))
    cost = pl.CostEstimate(flops=int(flops),
                           transcendentals=int(b_pad * out_pad),
                           bytes_accessed=int(bytes_accessed))

    out = pl.pallas_call(
        functools.partial(ppo_kernel, out_dim=out_dim, fuse_l2=fuse_l2),
        out_shape=jax.ShapeDtypeStruct((b_pad, nout), jnp.float32),
        grid=grid,
        in_specs=in_specs,
        out_specs=pl.BlockSpec((tb, nout), lambda i: (i, 0)),
        compiler_params=pltpu.CompilerParams(
            dimension_semantics=("parallel",)),
        cost_estimate=cost,
    )(*args)

    # Consumers that can use the packed (probs | value) slab directly should,
    # to avoid these extra slice ops.
    probs = out[:B, :out_dim]
    value = out[:B, out_dim:nout]
    return probs, value


def init_ppo_params(key, input_dim, output_dim, hidden=HIDDEN):
    """Deterministic PyTorch-style init: U(-1/sqrt(fan_in), 1/sqrt(fan_in))."""
    keys = jax.random.split(key, 12)

    def lin(kw, kb, fan_in, fan_out):
        bound = 1.0 / jnp.sqrt(jnp.float32(fan_in))
        w = jax.random.uniform(kw, (fan_in, fan_out), jnp.float32, -bound, bound)
        b = jax.random.uniform(kb, (1, fan_out), jnp.float32, -bound, bound)
        return w, b

    aw1, ab1 = lin(keys[0], keys[1], input_dim, hidden)
    aw2, ab2 = lin(keys[2], keys[3], hidden, hidden)
    aw3, ab3 = lin(keys[4], keys[5], hidden, output_dim)
    cw1, cb1 = lin(keys[6], keys[7], input_dim, hidden)
    cw2, cb2 = lin(keys[8], keys[9], hidden, hidden)
    cw3, cb3 = lin(keys[10], keys[11], hidden, 1)
    return dict(aw1=aw1, ab1=ab1, aw2=aw2, ab2=ab2, aw3=aw3, ab3=ab3,
                cw1=cw1, cb1=cb1, cw2=cw2, cb2=cb2, cw3=cw3, cb3=cb3)


def ppo_reference(state, p):
    """Pure-JAX f32 reference mirroring the PyTorch forward."""
    h = jnp.maximum(state @ p["aw1"] + p["ab1"], 0.0)
    h = jnp.maximum(h @ p["aw2"] + p["ab2"], 0.0)
    probs = jax.nn.softmax(h @ p["aw3"] + p["ab3"], axis=-1)
    g = jnp.maximum(state @ p["cw1"] + p["cb1"], 0.0)
    g = jnp.maximum(g @ p["cw2"] + p["cb2"], 0.0)
    value = g @ p["cw3"] + p["cb3"]
    return probs, value


def ppo_reference_mixed(state, p):
    """Reference with the kernel's mixed precision: bf16 matmul operands,
    f32 accumulation and elementwise math."""
    bf = jnp.bfloat16

    def mm(a, w):
        return jnp.dot(a.astype(bf), w.astype(bf),
                       preferred_element_type=jnp.float32)

    h = jnp.maximum(mm(state, p["aw1"]) + p["ab1"], 0.0)
    h = jnp.maximum(mm(h, p["aw2"]) + p["ab2"], 0.0)
    probs = jax.nn.softmax(mm(h, p["aw3"]) + p["ab3"], axis=-1)
    g = jnp.maximum(mm(state, p["cw1"]) + p["cb1"], 0.0)
    g = jnp.maximum(mm(g, p["cw2"]) + p["cb2"], 0.0)
    value = g @ p["cw3"] + p["cb3"]                # critic head stays f32
    return probs, value


def _check(state, params, packed, out_dim, *, block_b=512):
    probs, value = ppo_forward(state, packed, block_b=block_b)
    jax.block_until_ready((probs, value))
    B = state.shape[0]
    assert probs.shape == (B, out_dim) and value.shape == (B, 1)

    # Tight check against the matching mixed-precision reference.
    mp_probs, mp_value = ppo_reference_mixed(state, params)
    assert jnp.allclose(probs, mp_probs, atol=1e-4, rtol=1e-4)
    assert jnp.allclose(value, mp_value, atol=1e-4, rtol=1e-4)
    assert jnp.allclose(jnp.sum(probs, axis=-1), 1.0, atol=1e-4)

    # Loose check against the full-f32 PyTorch-style reference (bf16 operands).
    f_probs, f_value = ppo_reference(state, params)
    assert jnp.allclose(probs, f_probs, atol=3e-2)
    assert jnp.allclose(value, f_value, atol=3e-2)


if __name__ == "__main__":
    key = jax.random.PRNGKey(0)
    k_param, k_state1, k_state2 = jax.random.split(key, 3)

    input_dim, output_dim = 32, 8
    params = init_ppo_params(k_param, input_dim, output_dim)

    fuse = _mxu_is_256()
    packed = pack_ppo_params(params, fuse_l2=fuse)
    packed_alt = pack_ppo_params(params, fuse_l2=not fuse)   # exercise other path too

    # Small batch (single tile, padded internally).
    state_small = jax.random.normal(k_state1, (2, input_dim), jnp.float32)
    _check(state_small, params, packed, output_dim)

    # Larger batch: 2-step grid (both TCs on v7x) and a multi-step/padded grid.
    state_big = jax.random.normal(k_state2, (300, input_dim), jnp.float32)
    _check(state_big, params, packed, output_dim)             # grid = (2,)
    _check(state_big, params, packed, output_dim, block_b=64)  # grid = (5,)
    _check(state_big, params, packed_alt, output_dim)          # alternate layer-2 path

    print("KERNEL_OK")
</pallas_src>

<mosaic_0001>
module attributes {stable_mosaic.version = 11 : i64} {
  func.func @ppo_kernel(%arg0: i32, %arg1: memref<8x32xf32, #tpu.memory_space<vmem>>, %arg2: memref<32x256xbf16, #tpu.memory_space<vmem>>, %arg3: memref<1x256xf32, #tpu.memory_space<vmem>>, %arg4: memref<256x256xbf16, #tpu.memory_space<vmem>>, %arg5: memref<1x256xf32, #tpu.memory_space<vmem>>, %arg6: memref<128x128xbf16, #tpu.memory_space<vmem>>, %arg7: memref<1x128xf32, #tpu.memory_space<vmem>>, %arg8: memref<1x128xf32, #tpu.memory_space<vmem>>, %arg9: memref<1xf32, #tpu.memory_space<smem>>, %arg10: memref<8x9xf32, #tpu.memory_space<vmem>>) attributes {dimension_semantics = [#tpu.dimension_semantics<parallel>], iteration_bounds = array<i64: 1>, scalar_prefetch = 0 : i64, scratch_operands = 0 : i64, tpu.core_type = #tpu.core_type<tc>, window_params = [{transform_indices = @transform_0, window_bounds = array<i64: 8, 32>}, {pipeline_mode = #tpu.pipeline_mode<synchronous>, transform_indices = @transform_1, window_bounds = array<i64: 32, 256>}, {pipeline_mode = #tpu.pipeline_mode<synchronous>, transform_indices = @transform_2, window_bounds = array<i64: 1, 256>}, {pipeline_mode = #tpu.pipeline_mode<synchronous>, transform_indices = @transform_3, window_bounds = array<i64: 256, 256>}, {pipeline_mode = #tpu.pipeline_mode<synchronous>, transform_indices = @transform_4, window_bounds = array<i64: 1, 256>}, {pipeline_mode = #tpu.pipeline_mode<synchronous>, transform_indices = @transform_5, window_bounds = array<i64: 128, 128>}, {pipeline_mode = #tpu.pipeline_mode<synchronous>, transform_indices = @transform_6, window_bounds = array<i64: 1, 128>}, {pipeline_mode = #tpu.pipeline_mode<synchronous>, transform_indices = @transform_7, window_bounds = array<i64: 1, 128>}, {transform_indices = @transform_8, window_bounds = array<i64: 1>}, {transform_indices = @transform_9, window_bounds = array<i64: 8, 9>}]} {
    %c0 = arith.constant 0 : index
    %c0_0 = arith.constant 0 : index
    %0 = vector.load %arg1[%c0, %c0_0] : memref<8x32xf32, #tpu.memory_space<vmem>>, vector<8x32xf32>
    %1 = arith.truncf %0 : vector<8x32xf32> to vector<8x32xbf16>
    %c0_1 = arith.constant 0 : index
    %c0_2 = arith.constant 0 : index
    %2 = vector.load %arg2[%c0_1, %c0_2] : memref<32x256xbf16, #tpu.memory_space<vmem>>, vector<32x256xbf16>
    %cst = arith.constant dense<0.000000e+00> : vector<8x256xf32>
    %3 = tpu.matmul %1, %2, %cst {dimension_numbers = #tpu.dot_dimension_numbers<[1], [0], [0], [1], [0, 0, 1, 1], [], []>} : vector<8x32xbf16>, vector<32x256xbf16>, vector<8x256xf32> -> vector<8x256xf32>
    %c0_3 = arith.constant 0 : index
    %c0_4 = arith.constant 0 : index
    %4 = vector.load %arg3[%c0_3, %c0_4] : memref<1x256xf32, #tpu.memory_space<vmem>>, vector<1x256xf32>
    %5 = vector.broadcast %4 : vector<1x256xf32> to vector<8x256xf32>
    %6 = arith.addf %3, %5 : vector<8x256xf32>
    %cst_5 = arith.constant 0.000000e+00 : f32
    %7 = vector.broadcast %cst_5 : f32 to vector<8x256xf32>
    %8 = arith.maximumf %6, %7 : vector<8x256xf32>
    %9 = arith.truncf %8 : vector<8x256xf32> to vector<8x256xbf16>
    %c0_6 = arith.constant 0 : index
    %c0_7 = arith.constant 0 : index
    %10 = vector.load %arg4[%c0_6, %c0_7] : memref<256x256xbf16, #tpu.memory_space<vmem>>, vector<256x256xbf16>
    %cst_8 = arith.constant dense<0.000000e+00> : vector<8x256xf32>
    %11 = tpu.matmul %9, %10, %cst_8 {dimension_numbers = #tpu.dot_dimension_numbers<[1], [0], [0], [1], [0, 0, 1, 1], [], []>} : vector<8x256xbf16>, vector<256x256xbf16>, vector<8x256xf32> -> vector<8x256xf32>
    %c0_9 = arith.constant 0 : index
    %c0_10 = arith.constant 0 : index
    %12 = vector.load %arg5[%c0_9, %c0_10] : memref<1x256xf32, #tpu.memory_space<vmem>>, vector<1x256xf32>
    %13 = vector.broadcast %12 : vector<1x256xf32> to vector<8x256xf32>
    %14 = arith.addf %11, %13 : vector<8x256xf32>
    %cst_11 = arith.constant 0.000000e+00 : f32
    %15 = vector.broadcast %cst_11 : f32 to vector<8x256xf32>
    %16 = arith.maximumf %14, %15 : vector<8x256xf32>
    %17 = vector.extract_strided_slice %16 {offsets = [0, 0], sizes = [8, 128], strides = [1, 1]} : vector<8x256xf32> to vector<8x128xf32>
    %18 = vector.extract_strided_slice %16 {offsets = [0, 128], sizes = [8, 128], strides = [1, 1]} : vector<8x256xf32> to vector<8x128xf32>
    %19 = arith.truncf %17 : vector<8x128xf32> to vector<8x128xbf16>
    %c0_12 = arith.constant 0 : index
    %c0_13 = arith.constant 0 : index
    %20 = vector.load %arg6[%c0_12, %c0_13] : memref<128x128xbf16, #tpu.memory_space<vmem>>, vector<128x128xbf16>
    %cst_14 = arith.constant dense<0.000000e+00> : vector<8x128xf32>
    %21 = tpu.matmul %19, %20, %cst_14 {dimension_numbers = #tpu.dot_dimension_numbers<[1], [0], [0], [1], [0, 0, 1, 1], [], []>} : vector<8x128xbf16>, vector<128x128xbf16>, vector<8x128xf32> -> vector<8x128xf32>
    %c0_15 = arith.constant 0 : index
    %c0_16 = arith.constant 0 : index
    %22 = vector.load %arg7[%c0_15, %c0_16] : memref<1x128xf32, #tpu.memory_space<vmem>>, vector<1x128xf32>
    %23 = vector.broadcast %22 : vector<1x128xf32> to vector<8x128xf32>
    %24 = arith.addf %21, %23 : vector<8x128xf32>
    %cst_17 = arith.constant dense<0xFF800000> : vector<8xf32>
    %25 = vector.multi_reduction <maximumf>, %24, %cst_17 [1] : vector<8x128xf32> to vector<8xf32>
    %26 = vector.shape_cast %25 : vector<8xf32> to vector<8x1xf32>
    %27 = vector.broadcast %26 : vector<8x1xf32> to vector<8x128xf32>
    %28 = arith.subf %24, %27 : vector<8x128xf32>
    %29 = math.exp %28 : vector<8x128xf32>
    %cst_18 = arith.constant dense<0.000000e+00> : vector<8xf32>
    %30 = vector.multi_reduction <add>, %29, %cst_18 [1] : vector<8x128xf32> to vector<8xf32>
    %31 = vector.shape_cast %30 : vector<8xf32> to vector<8x1xf32>
    %32 = tpu.reciprocal %31 {approx = true} : vector<8x1xf32> -> vector<8x1xf32>
    %33 = arith.mulf %31, %32 : vector<8x1xf32>
    %cst_19 = arith.constant 2.000000e+00 : f32
    %34 = vector.broadcast %cst_19 : f32 to vector<8x1xf32>
    %35 = arith.subf %34, %33 : vector<8x1xf32>
    %36 = arith.mulf %32, %35 : vector<8x1xf32>
    %37 = vector.broadcast %36 : vector<8x1xf32> to vector<8x128xf32>
    %38 = arith.mulf %29, %37 : vector<8x128xf32>
    %c0_20 = arith.constant 0 : index
    %c0_21 = arith.constant 0 : index
    %39 = vector.load %arg8[%c0_20, %c0_21] : memref<1x128xf32, #tpu.memory_space<vmem>>, vector<1x128xf32>
    %40 = vector.broadcast %39 : vector<1x128xf32> to vector<8x128xf32>
    %41 = arith.mulf %18, %40 : vector<8x128xf32>
    %cst_22 = arith.constant dense<0.000000e+00> : vector<8xf32>
    %42 = vector.multi_reduction <add>, %41, %cst_22 [1] : vector<8x128xf32> to vector<8xf32>
    %43 = vector.shape_cast %42 : vector<8xf32> to vector<8x1xf32>
    %c0_23 = arith.constant 0 : index
    %44 = memref.load %arg9[%c0_23] : memref<1xf32, #tpu.memory_space<smem>>
    %45 = vector.broadcast %44 : f32 to vector<8x1xf32>
    %46 = arith.addf %43, %45 : vector<8x1xf32>
    %47 = tpu.iota {dimensions = array<i32: 1>} : vector<8x128xi32>
    %c8_i32 = arith.constant 8 : i32
    %48 = vector.broadcast %c8_i32 : i32 to vector<8x128xi32>
    %49 = arith.cmpi eq, %47, %48 : vector<8x128xi32>
    %50 = vector.shape_cast %46 : vector<8x1xf32> to vector<8x1xf32>
    %51 = vector.broadcast %50 : vector<8x1xf32> to vector<8x128xf32>
    %52 = arith.select %49, %51, %38 : vector<8x128xi1>, vector<8x128xf32>
    %53 = vector.extract_strided_slice %52 {offsets = [0, 0], sizes = [8, 9], strides = [1, 1]} : vector<8x128xf32> to vector<8x9xf32>
    %c0_24 = arith.constant 0 : index
    %c0_25 = arith.constant 0 : index
    %54 = vector.load %arg10[%c0_24, %c0_25] : memref<8x9xf32, #tpu.memory_space<vmem>>, vector<8x9xf32>
    tpu.vector_store %arg10[%c0_24, %c0_25], %53 {strides = array<i32>} : memref<8x9xf32, #tpu.memory_space<vmem>>, vector<8x9xf32>,
    return
  }
  func.func @transform_0(%arg0: i32) -> (i32, i32) {
    %c0_i32 = arith.constant 0 : i32
    %c0_i32_0 = arith.constant 0 : i32
    return %arg0, %c0_i32 : i32, i32
  }
  func.func @transform_1(%arg0: i32) -> (i32, i32) {
    %c0_i32 = arith.constant 0 : i32
    %c0_i32_0 = arith.constant 0 : i32
    %c0_i32_1 = arith.constant 0 : i32
    return %c0_i32, %c0_i32_0 : i32, i32
  }
  func.func @transform_2(%arg0: i32) -> (i32, i32) {
    %c0_i32 = arith.constant 0 : i32
    %c0_i32_0 = arith.constant 0 : i32
    %c0_i32_1 = arith.constant 0 : i32
    return %c0_i32, %c0_i32_0 : i32, i32
  }
  func.func @transform_3(%arg0: i32) -> (i32, i32) {
    %c0_i32 = arith.constant 0 : i32
    %c0_i32_0 = arith.constant 0 : i32
    %c0_i32_1 = arith.constant 0 : i32
    return %c0_i32, %c0_i32_0 : i32, i32
  }
  func.func @transform_4(%arg0: i32) -> (i32, i32) {
    %c0_i32 = arith.constant 0 : i32
    %c0_i32_0 = arith.constant 0 : i32
    %c0_i32_1 = arith.constant 0 : i32
    return %c0_i32, %c0_i32_0 : i32, i32
  }
  func.func @transform_5(%arg0: i32) -> (i32, i32) {
    %c0_i32 = arith.constant 0 : i32
    %c0_i32_0 = arith.constant 0 : i32
    %c0_i32_1 = arith.constant 0 : i32
    return %c0_i32, %c0_i32_0 : i32, i32
  }
  func.func @transform_6(%arg0: i32) -> (i32, i32) {
    %c0_i32 = arith.constant 0 : i32
    %c0_i32_0 = arith.constant 0 : i32
    %c0_i32_1 = arith.constant 0 : i32
    return %c0_i32, %c0_i32_0 : i32, i32
  }
  func.func @transform_7(%arg0: i32) -> (i32, i32) {
    %c0_i32 = arith.constant 0 : i32
    %c0_i32_0 = arith.constant 0 : i32
    %c0_i32_1 = arith.constant 0 : i32
    return %c0_i32, %c0_i32_0 : i32, i32
  }
  func.func @transform_8(%arg0: i32) -> i32 {
    %c0_i32 = arith.constant 0 : i32
    %c0_i32_0 = arith.constant 0 : i32
    return %c0_i32 : i32
  }
  func.func @transform_9(%arg0: i32) -> (i32, i32) {
    %c0_i32 = arith.constant 0 : i32
    %c0_i32_0 = arith.constant 0 : i32
    return %arg0, %c0_i32 : i32, i32
  }
}

</mosaic_0001>

<llo_original>
// kernel: tpu_custom_call.1
$region0: #{tpu_custom_call.1}
  #allocation0 [shape = 'u32[]', space=smem, size = 0x4, offset = 0x4, fixed_abs, tag = 'smem constant byte address 0x4 - core index']
  #allocation1 [shape = 'u32[144,128]{1,0:T(1,128)}', space=vmem, size = 0x12000, scoped, tag = 'internal scratch']
  #allocation2 [shape = 'f32[1]{0:T(128)S(6)}', space=smem, size = 0x200, scoped, tag = 'scoped memory for tpu_custom_call.1']
  %s0 = inlined_call_operand.hbm [shape: f32[8,32], index: 0, kind: input, shape index: {}]
  %s1 = inlined_call_operand.hbm [shape: bf16[32,256], index: 1, kind: input, shape index: {}]
  %s2 = inlined_call_operand.vmem [shape: f32[1,256], index: 2, kind: input, shape index: {}]
  %s3 = inlined_call_operand.hbm [shape: bf16[256,256], index: 3, kind: input, shape index: {}]
  %s4 = inlined_call_operand.vmem [shape: f32[1,256], index: 4, kind: input, shape index: {}]
  %s5 = inlined_call_operand.hbm [shape: bf16[128,128], index: 5, kind: input, shape index: {}]
  %s6 = inlined_call_operand.vmem [shape: f32[1,128], index: 6, kind: input, shape index: {}]
  %s7 = inlined_call_operand.vmem [shape: f32[1,128], index: 7, kind: input, shape index: {}]
  %s8 = inlined_call_operand.<no memory space> [shape: f32[1], index: 8, kind: input, shape index: {}]
  %s9 = inlined_call_operand.hbm [shape: f32[8,9], index: 9, kind: output, shape index: {}]
  %s10 = sld [smem:[#allocation0]]
  $region62: #{tpu_custom_call.1} parent=0
    _
  %s12 = ssub.s32 1, %s10
  %s13 = scalar_select 0, %s12, %s10
  %14 = sst [smem:[#allocation2]] %s8
  $region1: #{tpu_custom_call.1} parent=0
    #allocation3 [shape = 'u8[4096]{0}', space=vmem, size = 0x1000, scoped, tag = 'input window, operand 0, single buffered']
    #allocation4 [shape = 's32[1]{0}', space=sflag, size = 0x4, scoped, tag = 'scoped memory for tpu_custom_call.1']
    #allocation5 [shape = 's32[1]{0}', space=sflag, size = 0x4, scoped, tag = 'scoped memory for tpu_custom_call.1']
    #allocation6 [shape = 'u8[16384]{0}', space=vmem, size = 0x4000, scoped, tag = 'input window, operand 1, single buffered']
    #allocation7 [shape = 's32[1]{0}', space=sflag, size = 0x4, scoped, tag = 'scoped memory for tpu_custom_call.1']
    #allocation8 [shape = 'u8[131072]{0}', space=vmem, size = 0x20000, scoped, tag = 'input window, operand 3, single buffered']
    #allocation9 [shape = 'u8[32768]{0}', space=vmem, size = 0x8000, scoped, tag = 'input window, operand 5, single buffered']
    #allocation10 [shape = 's32[1]{0}', space=sflag, size = 0x4, scoped, tag = 'scoped memory for tpu_custom_call.1']
    #allocation11 [shape = 'u8[4096]{0}', space=vmem, size = 0x1000, scoped, tag = 'output window, operand 0, single buffered']
    %15 = vsyncpa [#allocation4], 0
    %16 = vsyncpa [#allocation7], 0
    %17 = vsyncpa [#allocation10], 0
    %18 = vsyncpa [#allocation5], 0
    // Predicated region
    $region2: #{tpu_custom_call.1} parent=1 // pred_check
      _
    $region3: #{tpu_custom_call.1} parent=1 // pred_check_branch
      %20 = sbr.rel (0) target = $region5
    $region4: #{tpu_custom_call.1} parent=1 // pred_region
      %s22 = ssub.s32 128, 128
      %23 = vsyncadd [#allocation4], %s22
      %s25 = sshll.u32 [#allocation3], 4
      %s26 = int_to_ptr.vmem [resolvable:$true] %s25
      %28 = dma.hbm_to_vmem [thread:$0]  %s0, 128, %s26, [#allocation4]
    $region5: #{tpu_custom_call.1} parent=1 // pred_fallthru
      _
    // Predicated region
    $region6: #{tpu_custom_call.1} parent=1 // pred_check
      _
    $region7: #{tpu_custom_call.1} parent=1 // pred_check_branch
      %30 = sbr.rel (0) target = $region9
    $region8: #{tpu_custom_call.1} parent=1 // pred_region
      %s32 = ssub.s32 512, 512
      %33 = vsyncadd [#allocation7], %s32
      %s34 = sshll.u32 [#allocation6], 4
      %s35 = int_to_ptr.vmem [resolvable:$true] %s34
      %40 = dma.hbm_to_vmem [thread:$0]  %s1, 512, %s35, [#allocation7], 128, 128, 8
    $region9: #{tpu_custom_call.1} parent=1 // pred_fallthru
      _
    // Predicated region
    $region10: #{tpu_custom_call.1} parent=1 // pred_check
      _
    $region11: #{tpu_custom_call.1} parent=1 // pred_check_branch
      %42 = sbr.rel (0) target = $region13
    $region12: #{tpu_custom_call.1} parent=1 // pred_region
      _
    $region13: #{tpu_custom_call.1} parent=1 // pred_fallthru
      _
    // Predicated region
    $region14: #{tpu_custom_call.1} parent=1 // pred_check
      _
    $region15: #{tpu_custom_call.1} parent=1 // pred_check_branch
      %44 = sbr.rel (0) target = $region17
    $region16: #{tpu_custom_call.1} parent=1 // pred_region
      %s46 = ssub.s32 4096, 4096
      %47 = vsyncadd [#allocation7], %s46
      %s48 = sshll.u32 [#allocation8], 4
      %s49 = int_to_ptr.vmem [resolvable:$true] %s48
      %54 = dma.hbm_to_vmem [thread:$0]  %s3, 4096, %s49, [#allocation7], 128, 128, 8
    $region17: #{tpu_custom_call.1} parent=1 // pred_fallthru
      _
    // Predicated region
    $region18: #{tpu_custom_call.1} parent=1 // pred_check
      _
    $region19: #{tpu_custom_call.1} parent=1 // pred_check_branch
      %56 = sbr.rel (0) target = $region21
    $region20: #{tpu_custom_call.1} parent=1 // pred_region
      _
    $region21: #{tpu_custom_call.1} parent=1 // pred_fallthru
      _
    // Predicated region
    $region22: #{tpu_custom_call.1} parent=1 // pred_check
      _
    $region23: #{tpu_custom_call.1} parent=1 // pred_check_branch
      %58 = sbr.rel (0) target = $region25
    $region24: #{tpu_custom_call.1} parent=1 // pred_region
      %s60 = ssub.s32 1024, 1024
      %61 = vsyncadd [#allocation10], %s60
      %s62 = sshll.u32 [#allocation9], 4
      %s63 = int_to_ptr.vmem [resolvable:$true] %s62
      %68 = dma.hbm_to_vmem [thread:$0]  %s5, 1024, %s63, [#allocation10], 64, 64, 4
    $region25: #{tpu_custom_call.1} parent=1 // pred_fallthru
      _
    // Predicated region
    $region26: #{tpu_custom_call.1} parent=1 // pred_check
      _
    $region27: #{tpu_custom_call.1} parent=1 // pred_check_branch
      %70 = sbr.rel (0) target = $region29
    $region28: #{tpu_custom_call.1} parent=1 // pred_region
      _
    $region29: #{tpu_custom_call.1} parent=1 // pred_fallthru
      _
    // Predicated region
    $region30: #{tpu_custom_call.1} parent=1 // pred_check
      _
    $region31: #{tpu_custom_call.1} parent=1 // pred_check_branch
      %72 = sbr.rel (0) target = $region33
    $region32: #{tpu_custom_call.1} parent=1 // pred_region
      _
    $region33: #{tpu_custom_call.1} parent=1 // pred_fallthru
      _
    // Predicated region
    $region34: #{tpu_custom_call.1} parent=1 // pred_check
      _
    $region35: #{tpu_custom_call.1} parent=1 // pred_check_branch
      %74 = sbr.rel (0) target = $region37
    $region36: #{tpu_custom_call.1} parent=1 // pred_region
      _
    $region37: #{tpu_custom_call.1} parent=1 // pred_fallthru
      _
    // Predicated region
    $region38: #{tpu_custom_call.1} parent=1 // pred_check
      _
    $region39: #{tpu_custom_call.1} parent=1 // pred_check_branch
      %76 = sbr.rel (0) target = $region41
    $region40: #{tpu_custom_call.1} parent=1 // pred_region
      %77 = dma.done [#allocation4], 128
    $region41: #{tpu_custom_call.1} parent=1 // pred_fallthru
      _
    // Predicated region
    $region42: #{tpu_custom_call.1} parent=1 // pred_check
      _
    $region43: #{tpu_custom_call.1} parent=1 // pred_check_branch
      %79 = sbr.rel (0) target = $region45
    $region44: #{tpu_custom_call.1} parent=1 // pred_region
      %80 = dma.done [#allocation7], 512
    $region45: #{tpu_custom_call.1} parent=1 // pred_fallthru
      _
    // Predicated region
    $region46: #{tpu_custom_call.1} parent=1 // pred_check
      _
    $region47: #{tpu_custom_call.1} parent=1 // pred_check_branch
      %82 = sbr.rel (0) target = $region49
    $region48: #{tpu_custom_call.1} parent=1 // pred_region
      %83 = dma.done [#allocation7], 4096
    $region49: #{tpu_custom_call.1} parent=1 // pred_fallthru
      _
    // Predicated region
    $region50: #{tpu_custom_call.1} parent=1 // pred_check
      _
    $region51: #{tpu_custom_call.1} parent=1 // pred_check_branch
      %85 = sbr.rel (0) target = $region53
    $region52: #{tpu_custom_call.1} parent=1 // pred_region
      %86 = dma.done [#allocation10], 1024
    $region53: #{tpu_custom_call.1} parent=1 // pred_fallthru
      _
    %v88 = vld [vmem:[#allocation3] sm:$0xff]
    %v89 = vpack.c.bf16 %v88, %v88
    %v90 = vld [vmem:[#allocation6] sm:$0xff]
    %v91 = vld [vmem:[#allocation6 + $0x8] sm:$0xff]
    %v92 = vld [vmem:[#allocation6 + $0x10] sm:$0xff]
    %v93 = vld [vmem:[#allocation6 + $0x18] sm:$0xff]
    %v94 = vld [vmem:[%s2] sm:$0x3]
    %v96 = vlaneseq
    %v97 = vshrl.u32 %v96, 7
    %v98 = vsub.s32 0, %v97
    %v99 = vrot.slane %v94, %v98
    %v100 = vlaneseq
    %v101 = vshrl.u32 %v100, 7
    %v102 = vsub.s32 1, %v101
    %v103 = vrot.slane %v94, %v102
    %v110 = vunpack.c.l.b16 %v90
    %v111 = vunpack.c.h.b16 %v90
    %v112 = vunpack.c.l.b16 %v91
    %v113 = vunpack.c.h.b16 %v91
    %v114 = vunpack.c.l.b16 %v92
    %v115 = vunpack.c.h.b16 %v92
    %v116 = vunpack.c.l.b16 %v93
    %v117 = vunpack.c.h.b16 %v93
    %v118 = vpack.c.b16 %v112, %v110
    %v119 = vpack.c.b16 %v113, %v111
    %v120 = vpack.c.b16 %v116, %v114
    %v121 = vpack.c.b16 %v117, %v115
    %vm126 = vcmask 261120
    %v128 = vsel %vm126, %v89, 0
    %130 = vmatprep.subr.bf16.mxu0 %v119
    %131 = vmatpush1.bf16.msra.mxu0 %v118
    %132 = vmatprep.subr.bf16.mxu0 %v121
    %133 = vmatpush1.bf16.msra.mxu0 %v120
    %134 = vmatprep.subr.bf16.mxu0 0
    %135 = vmatpush1.bf16.msra.mxu0 0
    %136 = vmatprep.subr.bf16.mxu0 0
    %137 = vmatpush1.bf16.msra.mxu0 0
    %138 = vmatprep.subr.bf16.mxu0 0
    %139 = vmatpush1.bf16.msra.mxu0 0
    %140 = vmatprep.subr.bf16.mxu0 0
    %141 = vmatpush1.bf16.msra.mxu0 0
    %142 = vmatprep.subr.bf16.mxu0 0
    %143 = vmatpush1.bf16.msra.mxu0 0
    %144 = vmatprep.subr.bf16.mxu0 0
    %145 = vmatpush1.bf16.msra.mxu0 0
    %146 = vmatprep.subr.bf16.mxu0 0
    %147 = vmatpush1.bf16.msra.mxu0 0
    %148 = vmatprep.subr.bf16.mxu0 0
    %149 = vmatpush1.bf16.msra.mxu0 0
    %150 = vmatprep.subr.bf16.mxu0 0
    %151 = vmatpush1.bf16.msra.mxu0 0
    %152 = vmatprep.subr.bf16.mxu0 0
    %153 = vmatpush1.bf16.msra.mxu0 0
    %154 = vmatprep.subr.bf16.mxu0 0
    %155 = vmatpush1.bf16.msra.mxu0 0
    %156 = vmatprep.subr.bf16.mxu0 0
    %157 = vmatpush1.bf16.msra.mxu0 0
    %158 = vmatprep.subr.bf16.mxu0 0
    %159 = vmatpush1.bf16.msra.mxu0 0
    %160 = vmatprep.subr.bf16.mxu0 0
    %161 = vmatpush1.bf16.msra.mxu0 0
    %162 = vmatprep.mubr.bf16.mxu0 0
    %163 = vmatmul.mubr.bf16.gmra.mrb[0].mxu0 %v128
    %v164 = vpop.f32.mrb[0].mxu0
    %v165 = vadd.f32 %v99, %v164
    %v166 = vpop.f32.mrb[0].mxu0
    %v167 = vadd.f32 %v103, %v166
    %v168 = vpop.f32.mrb[0].mxu0
    %v169 = vpop.f32.mrb[0].mxu0
    %170 = vdwg.mxu0
    %v171 = vmax.f32 %v165, 0.0
    %v172 = vmax.f32 %v167, 0.0
    %v173 = vpack.c.bf16 %v171, %v171
    %v174 = vpack.c.bf16 %v172, %v172
    %v175 = vld [vmem:[#allocation8] sm:$0xff]
    %v176 = vld [vmem:[#allocation8 + $0x8] sm:$0xff]
    %v177 = vld [vmem:[#allocation8 + $0x10] sm:$0xff]
    %v178 = vld [vmem:[#allocation8 + $0x18] sm:$0xff]
    %v179 = vld [vmem:[#allocation8 + $0x20] sm:$0xff]
    %v180 = vld [vmem:[#allocation8 + $0x28] sm:$0xff]
    %v181 = vld [vmem:[#allocation8 + $0x30] sm:$0xff]
    %v182 = vld [vmem:[#allocation8 + $0x38] sm:$0xff]
    %v183 = vld [vmem:[#allocation8 + $0x40] sm:$0xff]
    %v184 = vld [vmem:[#allocation8 + $0x48] sm:$0xff]
    %v185 = vld [vmem:[#allocation8 + $0x50] sm:$0xff]
    %v186 = vld [vmem:[#allocation8 + $0x58] sm:$0xff]
    %v187 = vld [vmem:[#allocation8 + $0x60] sm:$0xff]
    %v188 = vld [vmem:[#allocation8 + $0x68] sm:$0xff]
    %v189 = vld [vmem:[#allocation8 + $0x70] sm:$0xff]
    %v190 = vld [vmem:[#allocation8 + $0x78] sm:$0xff]
    %v191 = vld [vmem:[#allocation8 + $0x80] sm:$0xff]
    %v192 = vld [vmem:[#allocation8 + $0x88] sm:$0xff]
    %v193 = vld [vmem:[#allocation8 + $0x90] sm:$0xff]
    %v194 = vld [vmem:[#allocation8 + $0x98] sm:$0xff]
    %v195 = vld [vmem:[#allocation8 + $0xa0] sm:$0xff]
    %v196 = vld [vmem:[#allocation8 + $0xa8] sm:$0xff]
    %v197 = vld [vmem:[#allocation8 + $0xb0] sm:$0xff]
    %v198 = vld [vmem:[#allocation8 + $0xb8] sm:$0xff]
    %v199 = vld [vmem:[#allocation8 + $0xc0] sm:$0xff]
    %v200 = vld [vmem:[#allocation8 + $0xc8] sm:$0xff]
    %v201 = vld [vmem:[#allocation8 + $0xd0] sm:$0xff]
    %v202 = vld [vmem:[#allocation8 + $0xd8] sm:$0xff]
    %v203 = vld [vmem:[#allocation8 + $0xe0] sm:$0xff]
    %v204 = vld [vmem:[#allocation8 + $0xe8] sm:$0xff]
    %v205 = vld [vmem:[#allocation8 + $0xf0] sm:$0xff]
    %v206 = vld [vmem:[#allocation8 + $0xf8] sm:$0xff]
    %v207 = vld [vmem:[%s4] sm:$0x3]
    %v209 = vlaneseq
    %v210 = vshrl.u32 %v209, 7
    %v211 = vsub.s32 0, %v210
    %v212 = vrot.slane %v207, %v211
    %v213 = vlaneseq
    %v214 = vshrl.u32 %v213, 7
    %v215 = vsub.s32 1, %v214
    %v216 = vrot.slane %v207, %v215
    %v251 = vunpack.c.l.b16 %v175
    %v252 = vunpack.c.h.b16 %v175
    %v253 = vunpack.c.l.b16 %v176
    %v254 = vunpack.c.h.b16 %v176
    %v255 = vunpack.c.l.b16 %v177
    %v256 = vunpack.c.h.b16 %v177
    %v257 = vunpack.c.l.b16 %v178
    %v258 = vunpack.c.h.b16 %v178
    %v259 = vunpack.c.l.b16 %v179
    %v260 = vunpack.c.h.b16 %v179
    %v261 = vunpack.c.l.b16 %v180
    %v262 = vunpack.c.h.b16 %v180
    %v263 = vunpack.c.l.b16 %v181
    %v264 = vunpack.c.h.b16 %v181
    %v265 = vunpack.c.l.b16 %v182
    %v266 = vunpack.c.h.b16 %v182
    %v267 = vunpack.c.l.b16 %v183
    %v268 = vunpack.c.h.b16 %v183
    %v269 = vunpack.c.l.b16 %v184
    %v270 = vunpack.c.h.b16 %v184
    %v271 = vunpack.c.l.b16 %v185
    %v272 = vunpack.c.h.b16 %v185
    %v273 = vunpack.c.l.b16 %v186
    %v274 = vunpack.c.h.b16 %v186
    %v275 = vunpack.c.l.b16 %v187
    %v276 = vunpack.c.h.b16 %v187
    %v277 = vunpack.c.l.b16 %v188
    %v278 = vunpack.c.h.b16 %v188
    %v279 = vunpack.c.l.b16 %v189
    %v280 = vunpack.c.h.b16 %v189
    %v281 = vunpack.c.l.b16 %v190
    %v282 = vunpack.c.h.b16 %v190
    %v283 = vunpack.c.l.b16 %v191
    %v284 = vunpack.c.h.b16 %v191
    %v285 = vunpack.c.l.b16 %v192
    %v286 = vunpack.c.h.b16 %v192
    %v287 = vunpack.c.l.b16 %v193
    %v288 = vunpack.c.h.b16 %v193
    %v289 = vunpack.c.l.b16 %v194
    %v290 = vunpack.c.h.b16 %v194
    %v291 = vunpack.c.l.b16 %v195
    %v292 = vunpack.c.h.b16 %v195
    %v293 = vunpack.c.l.b16 %v196
    %v294 = vunpack.c.h.b16 %v196
    %v295 = vunpack.c.l.b16 %v197
    %v296 = vunpack.c.h.b16 %v197
    %v297 = vunpack.c.l.b16 %v198
    %v298 = vunpack.c.h.b16 %v198
    %v299 = vunpack.c.l.b16 %v199
    %v300 = vunpack.c.h.b16 %v199
    %v301 = vunpack.c.l.b16 %v200
    %v302 = vunpack.c.h.b16 %v200
    %v303 = vunpack.c.l.b16 %v201
    %v304 = vunpack.c.h.b16 %v201
    %v305 = vunpack.c.l.b16 %v202
    %v306 = vunpack.c.h.b16 %v202
    %v307 = vunpack.c.l.b16 %v203
    %v308 = vunpack.c.h.b16 %v203
    %v309 = vunpack.c.l.b16 %v204
    %v310 = vunpack.c.h.b16 %v204
    %v311 = vunpack.c.l.b16 %v205
    %v312 = vunpack.c.h.b16 %v205
    %v313 = vunpack.c.l.b16 %v206
    %v314 = vunpack.c.h.b16 %v206
    %v315 = vpack.c.b16 %v253, %v251
    %v316 = vpack.c.b16 %v254, %v252
    %v317 = vpack.c.b16 %v257, %v255
    %v318 = vpack.c.b16 %v258, %v256
    %v319 = vpack.c.b16 %v261, %v259
    %v320 = vpack.c.b16 %v262, %v260
    %v321 = vpack.c.b16 %v265, %v263
    %v322 = vpack.c.b16 %v266, %v264
    %v323 = vpack.c.b16 %v269, %v267
    %v324 = vpack.c.b16 %v270, %v268
    %v325 = vpack.c.b16 %v273, %v271
    %v326 = vpack.c.b16 %v274, %v272
    %v327 = vpack.c.b16 %v277, %v275
    %v328 = vpack.c.b16 %v278, %v276
    %v329 = vpack.c.b16 %v281, %v279
    %v330 = vpack.c.b16 %v282, %v280
    %v331 = vpack.c.b16 %v285, %v283
    %v332 = vpack.c.b16 %v286, %v284
    %v333 = vpack.c.b16 %v289, %v287
    %v334 = vpack.c.b16 %v290, %v288
    %v335 = vpack.c.b16 %v293, %v291
    %v336 = vpack.c.b16 %v294, %v292
    %v337 = vpack.c.b16 %v297, %v295
    %v338 = vpack.c.b16 %v298, %v296
    %v339 = vpack.c.b16 %v301, %v299
    %v340 = vpack.c.b16 %v302, %v300
    %v341 = vpack.c.b16 %v305, %v303
    %v342 = vpack.c.b16 %v306, %v304
    %v343 = vpack.c.b16 %v309, %v307
    %v344 = vpack.c.b16 %v310, %v308
    %v345 = vpack.c.b16 %v313, %v311
    %v346 = vpack.c.b16 %v314, %v312
    %379 = vmatprep.subr.bf16.mxu0 %v316
    %380 = vmatpush1.bf16.msra.mxu0 %v315
    %381 = vmatprep.subr.bf16.mxu0 %v318
    %382 = vmatpush1.bf16.msra.mxu0 %v317
    %383 = vmatprep.subr.bf16.mxu0 %v320
    %384 = vmatpush1.bf16.msra.mxu0 %v319
    %385 = vmatprep.subr.bf16.mxu0 %v322
    %386 = vmatpush1.bf16.msra.mxu0 %v321
    %387 = vmatprep.subr.bf16.mxu0 %v324
    %388 = vmatpush1.bf16.msra.mxu0 %v323
    %389 = vmatprep.subr.bf16.mxu0 %v326
    %390 = vmatpush1.bf16.msra.mxu0 %v325
    %391 = vmatprep.subr.bf16.mxu0 %v328
    %392 = vmatpush1.bf16.msra.mxu0 %v327
    %393 = vmatprep.subr.bf16.mxu0 %v330
    %394 = vmatpush1.bf16.msra.mxu0 %v329
    %395 = vmatprep.subr.bf16.mxu0 %v332
    %396 = vmatpush1.bf16.msra.mxu0 %v331
    %397 = vmatprep.subr.bf16.mxu0 %v334
    %398 = vmatpush1.bf16.msra.mxu0 %v333
    %399 = vmatprep.subr.bf16.mxu0 %v336
    %400 = vmatpush1.bf16.msra.mxu0 %v335
    %401 = vmatprep.subr.bf16.mxu0 %v338
    %402 = vmatpush1.bf16.msra.mxu0 %v337
    %403 = vmatprep.subr.bf16.mxu0 %v340
    %404 = vmatpush1.bf16.msra.mxu0 %v339
    %405 = vmatprep.subr.bf16.mxu0 %v342
    %406 = vmatpush1.bf16.msra.mxu0 %v341
    %407 = vmatprep.subr.bf16.mxu0 %v344
    %408 = vmatpush1.bf16.msra.mxu0 %v343
    %409 = vmatprep.subr.bf16.mxu0 %v346
    %410 = vmatpush1.bf16.msra.mxu0 %v345
    %411 = vmatprep.mubr.bf16.mxu0 %v174
    %412 = vmatmul.mubr.bf16.gmra.mrb[0].mxu0 %v173
    %v413 = vpop.f32.mrb[0].mxu0
    %v414 = vadd.f32 %v212, %v413
    %v415 = vpop.f32.mrb[0].mxu0
    %v416 = vadd.f32 %v216, %v415
    %v417 = vpop.f32.mrb[0].mxu0
    %v418 = vpop.f32.mrb[0].mxu0
    %419 = vdwg.mxu0
    %v420 = vmax.f32 %v414, 0.0
    %v421 = vmax.f32 %v416, 0.0
    %v422 = vpack.c.bf16 %v420, %v420
    %v423 = vld [vmem:[#allocation9] sm:$0xf]
    %v424 = vld [vmem:[#allocation9 + $0x4] sm:$0xf]
    %v425 = vld [vmem:[#allocation9 + $0x8] sm:$0xf]
    %v426 = vld [vmem:[#allocation9 + $0xc] sm:$0xf]
    %v427 = vld [vmem:[#allocation9 + $0x10] sm:$0xf]
    %v428 = vld [vmem:[#allocation9 + $0x14] sm:$0xf]
    %v429 = vld [vmem:[#allocation9 + $0x18] sm:$0xf]
    %v430 = vld [vmem:[#allocation9 + $0x1c] sm:$0xf]
    %v431 = vld [vmem:[#allocation9 + $0x20] sm:$0xf]
    %v432 = vld [vmem:[#allocation9 + $0x24] sm:$0xf]
    %v433 = vld [vmem:[#allocation9 + $0x28] sm:$0xf]
    %v434 = vld [vmem:[#allocation9 + $0x2c] sm:$0xf]
    %v435 = vld [vmem:[#allocation9 + $0x30] sm:$0xf]
    %v436 = vld [vmem:[#allocation9 + $0x34] sm:$0xf]
    %v437 = vld [vmem:[#allocation9 + $0x38] sm:$0xf]
    %v438 = vld [vmem:[#allocation9 + $0x3c] sm:$0xf]
    %v439 = vld [vmem:[%s6] sm:$0x1]
    %v441 = vlaneseq
    %v442 = vshrl.u32 %v441, 7
    %v443 = vsub.s32 0, %v442
    %v444 = vrot.slane %v439, %v443
    %v462 = vunpack.c.l.b16 %v423
    %v463 = vunpack.c.l.b16 %v424
    %v464 = vunpack.c.l.b16 %v425
    %v465 = vunpack.c.l.b16 %v426
    %v466 = vunpack.c.l.b16 %v427
    %v467 = vunpack.c.l.b16 %v428
    %v468 = vunpack.c.l.b16 %v429
    %v469 = vunpack.c.l.b16 %v430
    %v470 = vunpack.c.l.b16 %v431
    %v471 = vunpack.c.l.b16 %v432
    %v472 = vunpack.c.l.b16 %v433
    %v473 = vunpack.c.l.b16 %v434
    %v474 = vunpack.c.l.b16 %v435
    %v475 = vunpack.c.l.b16 %v436
    %v476 = vunpack.c.l.b16 %v437
    %v477 = vunpack.c.l.b16 %v438
    %v478 = vpack.c.b16 %v463, %v462
    %v479 = vpack.c.b16 %v465, %v464
    %v480 = vpack.c.b16 %v467, %v466
    %v481 = vpack.c.b16 %v469, %v468
    %v482 = vpack.c.b16 %v471, %v470
    %v483 = vpack.c.b16 %v473, %v472
    %v484 = vpack.c.b16 %v475, %v474
    %v485 = vpack.c.b16 %v477, %v476
    %494 = vmatprep.subr.bf16.mxu0 0
    %495 = vmatpush1.bf16.msra.mxu0 %v478
    %496 = vmatprep.subr.bf16.mxu0 0
    %497 = vmatpush1.bf16.msra.mxu0 %v479
    %498 = vmatprep.subr.bf16.mxu0 0
    %499 = vmatpush1.bf16.msra.mxu0 %v480
    %500 = vmatprep.subr.bf16.mxu0 0
    %501 = vmatpush1.bf16.msra.mxu0 %v481
    %502 = vmatprep.subr.bf16.mxu0 0
    %503 = vmatpush1.bf16.msra.mxu0 %v482
    %504 = vmatprep.subr.bf16.mxu0 0
    %505 = vmatpush1.bf16.msra.mxu0 %v483
    %506 = vmatprep.subr.bf16.mxu0 0
    %507 = vmatpush1.bf16.msra.mxu0 %v484
    %508 = vmatprep.subr.bf16.mxu0 0
    %509 = vmatpush1.bf16.msra.mxu0 %v485
    %510 = vmatprep.subr.bf16.mxu0 0
    %511 = vmatpush1.bf16.msra.mxu0 0
    %512 = vmatprep.subr.bf16.mxu0 0
    %513 = vmatpush1.bf16.msra.mxu0 0
    %514 = vmatprep.subr.bf16.mxu0 0
    %515 = vmatpush1.bf16.msra.mxu0 0
    %516 = vmatprep.subr.bf16.mxu0 0
    %517 = vmatpush1.bf16.msra.mxu0 0
    %518 = vmatprep.subr.bf16.mxu0 0
    %519 = vmatpush1.bf16.msra.mxu0 0
    %520 = vmatprep.subr.bf16.mxu0 0
    %521 = vmatpush1.bf16.msra.mxu0 0
    %522 = vmatprep.subr.bf16.mxu0 0
    %523 = vmatpush1.bf16.msra.mxu0 0
    %524 = vmatprep.subr.bf16.mxu0 0
    %525 = vmatpush1.bf16.msra.mxu0 0
    %526 = vmatprep.mubr.bf16.mxu0 0
    %527 = vmatmul.mubr.bf16.gmra.mrb[0].mxu0 %v422
    %v528 = vpop.f32.mrb[0].mxu0
    %v529 = vadd.f32 %v444, %v528
    %v530 = vpop.f32.mrb[0].mxu0
    %v531 = vpop.f32.mrb[0].mxu0
    %v532 = vpop.f32.mrb[0].mxu0
    %533 = vdwg.mxu0
    %534 = vmax.xlane.f32.xlu0 %v529
    %v535 = vpop.xlane.xlu0 %534
    %v536 = vsub.f32 %v529, %v535
    %v537 = vmul.f32 %v536, 1.442695
    %v538 = vpow.pop %v537
    %539 = vadd.xlane.f32.xlu0 %v538
    %v540 = vpop.xlane.xlu0 %539
    %v541 = vrcp.pop %v540
    %v542 = vmul.f32 %v540, %v541
    %v543 = vsub.f32 2.0, %v542
    %v544 = vmul.f32 %v541, %v543
    %v545 = vmul.f32 %v538, %v544
    %v546 = vld [vmem:[%s7] sm:$0x1]
    %v548 = vlaneseq
    %v549 = vshrl.u32 %v548, 7
    %v550 = vsub.s32 0, %v549
    %v551 = vrot.slane %v546, %v550
    %v553 = vmul.f32 %v421, %v551
    %554 = vadd.xlane.f32.xlu0 %v553
    %v555 = vpop.xlane.xlu0 %554
    %s556 = sld [smem:[#allocation2]]
    %v557 = vstv %s556
    %v558 = vadd.f32 %v555, %v557
    %v559 = vlaneseq
    %v560 = vand.u32 %v559, 127
    %vm561 = vcmp.eq.s32.totalorder %v560, 8
    %v562 = vsel %vm561, %v558, %v545
    %vm563 = vcmask 72704
    %564 = vst.msk [vmem:[#allocation11] sm:$0xff] %vm563, %v562
    // Predicated region
    $region54: #{tpu_custom_call.1} parent=1 // pred_check
      _
    $region55: #{tpu_custom_call.1} parent=1 // pred_check_branch
      %566 = sbr.rel (0) target = $region57
    $region56: #{tpu_custom_call.1} parent=1 // pred_region
      %s568 = ssub.s32 128, 128
      %569 = vsyncadd [#allocation5], %s568
      %s571 = sshll.u32 [#allocation11], 4
      %s572 = int_to_ptr.vmem [resolvable:$true] %s571
      %574 = dma.vmem_to_hbm [thread:$0]  %s572, 128, %s9, [#allocation5]
    $region57: #{tpu_custom_call.1} parent=1 // pred_fallthru
      _
    // Predicated region
    $region58: #{tpu_custom_call.1} parent=1 // pred_check
      _
    $region59: #{tpu_custom_call.1} parent=1 // pred_check_branch
      %576 = sbr.rel (0) target = $region61
    $region60: #{tpu_custom_call.1} parent=1 // pred_region
      %577 = dma.done [#allocation5], 128
    $region61: #{tpu_custom_call.1} parent=1 // pred_fallthru
      _
    %578 = vsyncpa [#allocation4], 1
    %579 = vsyncpa [#allocation7], 1
    %580 = vsyncpa [#allocation10], 1
    %581 = vsyncpa [#allocation5], 1

</llo_original>
